<compile_context>
chip_gen: v7x
topology: tpu7x:2x2x1
jax: 0.10.0
libtpu: 0.0.40
codegen_flags: <defaults>
</compile_context>

<pallas_src>
import jax
import jax.numpy as jnp
from jax.experimental import pallas as pl
from jax.experimental.pallas import tpu as pltpu


def _spring_kernel(s_ref, x_ref, o_ref):
    # s_ref : SMEM (2,)      [k*dt*dt, 2*|eq_distance|]      (scalar prefetch)
    # x_ref : VMEM (8, tb)   rows = [p1_0x, p1_0y, p2_0x, p2_0y, p1x, p1y, p2x, p2y]
    # o_ref : VMEM (4, tb)   rows = [p1n_x, p1n_y, p2n_x, p2n_y]
    k_dt2 = s_ref[0]
    two_abs_eq = s_ref[1]

    x = x_ref[...]                       # one dense (8, tb) load
    p1_0 = x[0:2, :]
    p2_0 = x[2:4, :]
    p1 = x[4:6, :]
    p2 = x[6:8, :]

    diff = p2 - p1                       # (2, tb)
    dx = diff[0:1, :]
    dy = diff[1:2, :]
    dist = jnp.sqrt(dx * dx + dy * dy)   # (1, tb)

    # Force * dt*dt  ==  k*dt^2 * (dist - 2|eq|) * diff / dist
    f_dt2 = (k_dt2 * (dist - two_abs_eq) / dist) * diff   # (2, tb)

    o_ref[0:2, :] = 2.0 * p1 - p1_0 + f_dt2
    o_ref[2:4, :] = 2.0 * p2 - p2_0 - f_dt2


def ode_2objects_spring_forward(x, dt, k, eq_distance, *, tb=128):
    """x: (B, 2, 4) float; dt: python float; k, eq_distance: scalar params.

    Returns z_hat of shape (B, 1, 4), matching the PyTorch module.
    For very large B, raise tb (e.g. 512-1024) to amortize per-grid-step overhead.
    """
    B = x.shape[0]
    assert x.shape[1:] == (2, 4), "state must be (order=2, features=4)"
    assert tb % 128 == 0
    x = x.astype(jnp.float32)

    # Lane-dense layout: (B, 2, 4) -> (B, 8) -> (8, B); batch on lanes.
    xt = x.reshape(B, 8).T                                     # (8, B)

    # Pad batch (lanes) to a multiple of the lane tile.
    Bp = ((B + tb - 1) // tb) * tb
    if Bp != B:
        # Padded columns get p1=(0,0), p2=(1,1) so dist>0 there (avoids 0/0 in
        # lanes that are discarded anyway).
        pad_col = jnp.array([0.0, 0.0, 1.0, 1.0, 0.0, 0.0, 1.0, 1.0],
                            jnp.float32)[:, None]
        xt = jnp.concatenate([xt, jnp.tile(pad_col, (1, Bp - B))], axis=1)

    # Fold all scalar math in the wrapper (single SMEM prefetch operand).
    k_f = jnp.asarray(k, jnp.float32).reshape(())
    eq_f = jnp.asarray(eq_distance, jnp.float32).reshape(())
    dt_f = jnp.float32(dt)
    scalars = jnp.stack([k_f * dt_f * dt_f, 2.0 * jnp.abs(eq_f)])   # (2,)

    out_t = pl.pallas_call(
        _spring_kernel,
        out_shape=jax.ShapeDtypeStruct((4, Bp), jnp.float32),
        grid_spec=pltpu.PrefetchScalarGridSpec(
            num_scalar_prefetch=1,
            grid=(Bp // tb,),
            in_specs=[pl.BlockSpec((8, tb), lambda i, s: (0, i))],
            out_specs=pl.BlockSpec((4, tb), lambda i, s: (0, i)),
        ),
        compiler_params=pltpu.CompilerParams(
            dimension_semantics=("parallel",)),
    )(scalars, xt)

    # Back to the PyTorch output layout (B, 1, 4).
    return out_t[:, :B].T.reshape(B, 1, 4)


if __name__ == "__main__":
    key = jax.random.PRNGKey(0)

    B = 200          # not a multiple of 128 -> exercises padding + 2-step grid
    dt = 0.1
    k = 2.0
    eq_distance = 0.5

    x = jax.random.normal(key, (B, 2, 4), dtype=jnp.float32)

    z_hat = ode_2objects_spring_forward(
        x, dt, jnp.float32(k), jnp.float32(eq_distance), tb=128)
    jax.block_until_ready(z_hat)

    # Pure-JAX reference mirroring the PyTorch forward exactly.
    p1 = x[:, 1, 0:2]
    p2 = x[:, 1, 2:4]
    p1_0 = x[:, 0, 0:2]
    p2_0 = x[:, 0, 2:4]
    diff = p2 - p1
    dist = jnp.sqrt(jnp.sum(diff * diff, axis=1, keepdims=True))
    direction = diff / dist
    force = jnp.float32(k) * (dist - 2.0 * jnp.abs(jnp.float32(eq_distance))) * direction
    dt_f = jnp.float32(dt)
    p1_new = 2.0 * p1 - p1_0 + force * dt_f * dt_f
    p2_new = 2.0 * p2 - p2_0 - force * dt_f * dt_f
    ref = jnp.concatenate([p1_new[:, None, :], p2_new[:, None, :]], axis=2)  # (B,1,4)

    assert z_hat.shape == (B, 1, 4)
    assert jnp.allclose(z_hat, ref, atol=1e-4, rtol=1e-4), float(
        jnp.max(jnp.abs(z_hat - ref)))

    print("KERNEL_OK")
</pallas_src>

<mosaic_0001>
module attributes {stable_mosaic.version = 11 : i64} {
  func.func @_spring_kernel(%arg0: i32, %arg1: memref<2xf32, #tpu.memory_space<smem>>, %arg2: memref<8x128xf32, #tpu.memory_space<vmem>>, %arg3: memref<4x128xf32, #tpu.memory_space<vmem>>) attributes {dimension_semantics = [#tpu.dimension_semantics<parallel>], iteration_bounds = array<i64: 2>, scalar_prefetch = 1 : i64, scratch_operands = 0 : i64, tpu.core_type = #tpu.core_type<tc>, window_params = [{transform_indices = @transform_0, window_bounds = array<i64: 8, 128>}, {transform_indices = @transform_1, window_bounds = array<i64: 4, 128>}]} {
    %c0 = arith.constant 0 : index
    %0 = memref.load %arg1[%c0] : memref<2xf32, #tpu.memory_space<smem>>
    %c1 = arith.constant 1 : index
    %1 = memref.load %arg1[%c1] : memref<2xf32, #tpu.memory_space<smem>>
    %c0_0 = arith.constant 0 : index
    %c0_1 = arith.constant 0 : index
    %2 = vector.load %arg2[%c0_0, %c0_1] : memref<8x128xf32, #tpu.memory_space<vmem>>, vector<8x128xf32>
    %3 = vector.extract_strided_slice %2 {offsets = [0, 0], sizes = [2, 128], strides = [1, 1]} : vector<8x128xf32> to vector<2x128xf32>
    %4 = vector.extract_strided_slice %2 {offsets = [2, 0], sizes = [2, 128], strides = [1, 1]} : vector<8x128xf32> to vector<2x128xf32>
    %5 = vector.extract_strided_slice %2 {offsets = [4, 0], sizes = [2, 128], strides = [1, 1]} : vector<8x128xf32> to vector<2x128xf32>
    %6 = vector.extract_strided_slice %2 {offsets = [6, 0], sizes = [2, 128], strides = [1, 1]} : vector<8x128xf32> to vector<2x128xf32>
    %7 = arith.subf %6, %5 : vector<2x128xf32>
    %8 = vector.extract_strided_slice %7 {offsets = [0, 0], sizes = [1, 128], strides = [1, 1]} : vector<2x128xf32> to vector<1x128xf32>
    %9 = vector.extract_strided_slice %7 {offsets = [1, 0], sizes = [1, 128], strides = [1, 1]} : vector<2x128xf32> to vector<1x128xf32>
    %10 = arith.mulf %8, %8 : vector<1x128xf32>
    %11 = arith.mulf %9, %9 : vector<1x128xf32>
    %12 = arith.addf %10, %11 : vector<1x128xf32>
    %13 = math.sqrt %12 : vector<1x128xf32>
    %14 = vector.broadcast %1 : f32 to vector<1x128xf32>
    %15 = arith.subf %13, %14 : vector<1x128xf32>
    %16 = vector.broadcast %0 : f32 to vector<1x128xf32>
    %17 = arith.mulf %16, %15 : vector<1x128xf32>
    %18 = arith.divf %17, %13 : vector<1x128xf32>
    %19 = vector.broadcast %18 : vector<1x128xf32> to vector<2x128xf32>
    %20 = arith.mulf %19, %7 : vector<2x128xf32>
    %cst = arith.constant 2.000000e+00 : f32
    %21 = vector.broadcast %cst : f32 to vector<2x128xf32>
    %22 = arith.mulf %21, %5 : vector<2x128xf32>
    %23 = arith.subf %22, %3 : vector<2x128xf32>
    %24 = arith.addf %23, %20 : vector<2x128xf32>
    %c0_2 = arith.constant 0 : index
    %c0_3 = arith.constant 0 : index
    %25 = vector.load %arg3[%c0_2, %c0_3] : memref<4x128xf32, #tpu.memory_space<vmem>>, vector<2x128xf32>
    tpu.vector_store %arg3[%c0_2, %c0_3], %24 {strides = array<i32>} : memref<4x128xf32, #tpu.memory_space<vmem>>, vector<2x128xf32>,
    %cst_4 = arith.constant 2.000000e+00 : f32
    %26 = vector.broadcast %cst_4 : f32 to vector<2x128xf32>
    %27 = arith.mulf %26, %6 : vector<2x128xf32>
    %28 = arith.subf %27, %4 : vector<2x128xf32>
    %29 = arith.subf %28, %20 : vector<2x128xf32>
    %c2 = arith.constant 2 : index
    %c0_5 = arith.constant 0 : index
    %30 = vector.load %arg3[%c2, %c0_5] : memref<4x128xf32, #tpu.memory_space<vmem>>, vector<2x128xf32>
    tpu.vector_store %arg3[%c2, %c0_5], %29 {strides = array<i32>} : memref<4x128xf32, #tpu.memory_space<vmem>>, vector<2x128xf32>,
    return
  }
  func.func @transform_0(%arg0: i32, %arg1: memref<2xf32, #tpu.memory_space<smem>>) -> (i32, i32) {
    %c0_i32 = arith.constant 0 : i32
    %c0_i32_0 = arith.constant 0 : i32
    return %c0_i32, %arg0 : i32, i32
  }
  func.func @transform_1(%arg0: i32, %arg1: memref<2xf32, #tpu.memory_space<smem>>) -> (i32, i32) {
    %c0_i32 = arith.constant 0 : i32
    %c0_i32_0 = arith.constant 0 : i32
    return %c0_i32, %arg0 : i32, i32
  }
}

</mosaic_0001>

<llo_original>
// kernel: tpu_custom_call.1
$region0: #{tpu_custom_call.1}
  #allocation0 [shape = 'u32[]', space=smem, size = 0x4, offset = 0x4, fixed_abs, tag = 'smem constant byte address 0x4 - core index']
  #allocation1 [shape = 'u32[144,128]{1,0:T(1,128)}', space=vmem, size = 0x12000, scoped, tag = 'internal scratch']
  #allocation2 [shape = 's32[1]{0}', space=sflag, size = 0x4, scoped, tag = 'scoped memory for tpu_custom_call.1']
  #allocation3 [shape = 'u8[512]{0}', space=smem, size = 0x200, scoped, tag = 'prefetched SMEM operand 0']
  %s0 = inlined_call_operand.hbm [shape: f32[2], index: 0, kind: input, shape index: {}]
  %s1 = inlined_call_operand.hbm [shape: f32[8,256], index: 1, kind: input, shape index: {}]
  %s2 = inlined_call_operand.hbm [shape: f32[4,256], index: 2, kind: output, shape index: {}]
  %s3 = sld [smem:[#allocation0]]
  $region41: #{tpu_custom_call.1} parent=0
    _
  %s5 = ssub.s32 1, %s3
  %s6 = scalar_select 0, %s5, %s3
  %8 = dma.hbm_to_smem %s0, 16, [#allocation3], [#allocation2]
  %9 = dma.done [#allocation2], 16
  %10 = sfence
  $region1: #{tpu_custom_call.1} parent=0
    #allocation4 [shape = 'u8[8192]{0}', space=vmem, size = 0x2000, scoped, tag = 'input window, operand 1']
    #allocation5 [shape = 's32[2]{0}', space=sflag, size = 0x8, scoped, tag = 'scoped memory for tpu_custom_call.1']
    #allocation6 [shape = 's32[2]{0}', space=sflag, size = 0x8, scoped, tag = 'scoped memory for tpu_custom_call.1']
    #allocation7 [shape = 'u8[4096]{0}', space=vmem, size = 0x1000, scoped, tag = 'output window, operand 0']
    %11 = vsyncpa [#allocation5], 0
    %s12 = scalar_lea.sflag [#allocation5], 1
    %13 = vsyncpa %s12, 0
    %14 = vsyncpa [#allocation6], 0
    %s15 = scalar_lea.sflag [#allocation6], 1
    %16 = vsyncpa %s15, 0
    loop: start=0, step=1, limit=4
    $region2: #{tpu_custom_call.1} parent=1 // loop_pre_header
      _
    $region3: #{tpu_custom_call.1} parent=1 // loop_header
      %s18 = sphi 0, %s22
      %p19 = scmp.ge.s32.totalorder %s18, 4
      %s28 = sphi 0, %s30
      %s31 = sphi 0, %s28
      %s32 = sphi 0, %s31
      %s48 = sphi 0, %s32
      %s54 = sphi 0, %s56
      %s57 = sphi 0, %s54
      %s58 = sphi 0, %s57
      %s74 = sphi 0, %s58
    $region4: #{tpu_custom_call.1} parent=1 // loop_header_branch
      %21 = sbr.rel (%p19) target = $region8
    $region5: #{tpu_custom_call.1} parent=1 // loop_body
      %s23 = ssub.s32 %s18, 1
      %s24 = ssub.s32 %s18, 2
      %s25 = sadd.s32 %s18, 1
      %s26 = ssub.s32 %s18, %s25
      %p27 = scmp.eq.s32.totalorder %s26, 0
      %s29 = sadd.s32 %s28, 1
      %s30 = scalar_select %p27, %s28, %s29
      %p33 = pneg %p27
      %p34 = scmp.eq.s32.totalorder %s18, 1
      %p35 = por %p33, %p34
      %p36 = scmp.ne.s32.totalorder %s28, %s31
      %p37 = scmp.eq.s32.totalorder %s18, 0
      %p38 = por %p36, %p37
      %p39 = scmp.ne.s32.totalorder %s28, %s31
      %p40 = scmp.eq.s32.totalorder %s23, 1
      %p41 = por %p39, %p40
      %p42 = scmp.ne.s32.totalorder %s31, %s32
      %p43 = scmp.eq.s32.totalorder %s23, 0
      %p44 = por %p42, %p43
      %p45 = scmp.ne.s32.totalorder %s31, %s32
      %p46 = scmp.eq.s32.totalorder %s24, 1
      %p47 = por %p45, %p46
      %p49 = scmp.ne.s32.totalorder %s32, %s48
      %p50 = scmp.eq.s32.totalorder %s24, 0
      %p51 = por %p49, %p50
      %s52 = ssub.s32 %s18, %s25
      %p53 = scmp.eq.s32.totalorder %s52, 0
      %s55 = sadd.s32 %s54, 1
      %s56 = scalar_select %p53, %s54, %s55
      %p59 = pneg %p53
      %p60 = scmp.eq.s32.totalorder %s18, 1
      %p61 = por %p59, %p60
      %p62 = scmp.ne.s32.totalorder %s54, %s57
      %p63 = scmp.eq.s32.totalorder %s18, 0
      %p64 = por %p62, %p63
      %p65 = scmp.ne.s32.totalorder %s54, %s57
      %p66 = scmp.eq.s32.totalorder %s23, 1
      %p67 = por %p65, %p66
      %p68 = scmp.ne.s32.totalorder %s57, %s58
      %p69 = scmp.eq.s32.totalorder %s23, 0
      %p70 = por %p68, %p69
      %p71 = scmp.ne.s32.totalorder %s57, %s58
      %p72 = scmp.eq.s32.totalorder %s24, 1
      %p73 = por %p71, %p72
      %p75 = scmp.ne.s32.totalorder %s58, %s74
      %p76 = scmp.eq.s32.totalorder %s24, 0
      %p77 = por %p75, %p76
      %p78 = scmp.le.s32.totalorder 1, %s18
      %p79 = scmp.lt.s32.totalorder %s18, 3
      %p80 = pnand %p78, %p79
      %p81 = pneg %p80
      // Predicated region
      $region9: #{tpu_custom_call.1} parent=5 // pred_check
        _
      $region10: #{tpu_custom_call.1} parent=5 // pred_check_branch
        %83 = sbr.rel (%p80) target = $region12
      $region11: #{tpu_custom_call.1} parent=5 // pred_region
        %s84 = ssub.s32 %s18, 1
      $region12: #{tpu_custom_call.1} parent=5 // pred_fallthru
        _
      %p85 = scmp.lt.s32.totalorder %s18, 2
      // Predicated region
      $region13: #{tpu_custom_call.1} parent=5 // pred_check
        %p86 = pneg %p85
      $region14: #{tpu_custom_call.1} parent=5 // pred_check_branch
        %88 = sbr.rel (%p86) target = $region16
      $region15: #{tpu_custom_call.1} parent=5 // pred_region
        // Predicated region
        $region17: #{tpu_custom_call.1} parent=15 // pred_check
          %p89 = pneg %p38
        $region18: #{tpu_custom_call.1} parent=15 // pred_check_branch
          %91 = sbr.rel (%p89) target = $region20
        $region19: #{tpu_custom_call.1} parent=15 // pred_region
          %s92 = sand.u32 %s28, 1
          %s93 = scalar_lea.sflag [#allocation5], %s92
          %s94 = sand.u32 %s28, 1
          %s95 = smul.addr %s94, 8
          %s96 = scalar_lea.vmem [#allocation4], %s95
          %s98 = ssub.s32 128, 128
          %99 = vsyncadd %s93, %s98
          %s100 = smul.addr %s18, 128
          %s101 = scalar_lea.hbm %s1, %s100
          %s103 = sshll.u32 %s96, 4
          %s104 = int_to_ptr.vmem [resolvable:$true] %s103
          %106 = dma.hbm_to_vmem [thread:$0]  %s101, 128, %s104, %s93
        $region20: #{tpu_custom_call.1} parent=15 // pred_fallthru
          _
      $region16: #{tpu_custom_call.1} parent=5 // pred_fallthru
        _
      %p107 = scmp.le.s32.totalorder 1, %s18
      %p108 = scmp.lt.s32.totalorder %s18, 3
      %p109 = pnand %p107, %p108
      %p110 = pneg %p109
      // Predicated region
      $region21: #{tpu_custom_call.1} parent=5 // pred_check
        _
      $region22: #{tpu_custom_call.1} parent=5 // pred_check_branch
        %112 = sbr.rel (%p109) target = $region24
      $region23: #{tpu_custom_call.1} parent=5 // pred_region
        %s113 = ssub.s32 %s18, 1
        %s114 = sand.u32 %s31, 1
        %s115 = scalar_lea.sflag [#allocation5], %s114
        %s116 = sand.u32 %s31, 1
        %s117 = smul.addr %s116, 8
        %s118 = scalar_lea.vmem [#allocation4], %s117
        // Predicated region
        $region25: #{tpu_custom_call.1} parent=23 // pred_check
          %p119 = pneg %p44
        $region26: #{tpu_custom_call.1} parent=23 // pred_check_branch
          %121 = sbr.rel (%p119) target = $region28
        $region27: #{tpu_custom_call.1} parent=23 // pred_region
          %122 = dma.done %s115, 128
        $region28: #{tpu_custom_call.1} parent=23 // pred_fallthru
          _
        %s123 = sand.u32 %s31, 1
        %s124 = scalar_lea.sflag [#allocation5], %s123
        %s125 = sand.u32 %s31, 1
        %s126 = smul.addr %s125, 8
        %s127 = scalar_lea.vmem [#allocation4], %s126
        %p128 = pneg %p44
        %p129 = pneg %p41
        %p130 = pneg %p70
        %p131 = pneg %p67
        %s132 = sand.u32 %s57, 1
        %s133 = scalar_lea.sflag [#allocation6], %s132
        %s134 = sand.u32 %s57, 1
        %s135 = smul.addr %s134, 4
        %s136 = scalar_lea.vmem [#allocation7], %s135
        %s137 = sld [smem:[#allocation3]]
        %s138 = sld [smem:[#allocation3 + $0x1]]
        %v139 = vld [vmem:[%s118] sm:$0xff]
        %v141 = vrot.slane %v139, 6
        %v143 = vsub.f32 %v139, %v141
        %v144 = vmul.f32 %v143, %v143
        %v146 = vrot.slane %v144, 1
        %v148 = vadd.f32 %v144, %v146
        %v149 = vrsqrt.pop %v148
        %v150 = vmul.f32 %v148, %v149
        %vm151 = vcmp.eq.f32.partialorder %v148, inf
        %v152 = vsel %vm151, %v148, %v150
        %vm153 = vcmp.eq.f32.partialorder %v148, 0.0
        %v154 = vand.u32 %v148, 2147483648
        %v155 = vsel %vm153, %v154, %v152
        %v156 = vstv %s138
        %v157 = vsub.f32 %v155, %v156
        %v158 = vstv %s137
        %v159 = vmul.f32 %v158, %v157
        %v160 = vrcp.pop %v155
        %v161 = vmul.f32 %v159, %v160
        %v162 = vlaneseq
        %v163 = vshrl.u32 %v162, 7
        %v164 = vsub.s32 6, %v163
        %v165 = vrot.slane %v161, %v164
        %v166 = vmul.f32 %v165, %v143
        %v167 = vmul.f32 %v139, 2.0
        %v168 = vrot.slane %v139, 4
        %v170 = vsub.f32 %v167, %v168
        %v172 = vrot.slane %v166, 2
        %v174 = vadd.f32 %v170, %v172
        %175 = vst [vmem:[%s136 - $0x4] sm:$0x30] %v174
        %v176 = vsub.f32 %v170, %v166
        %177 = vst [vmem:[%s136 - $0x4] sm:$0xc0] %v176
        %s178 = sand.u32 %s57, 1
        %s179 = scalar_lea.sflag [#allocation6], %s178
        %s180 = sand.u32 %s57, 1
        %s181 = smul.addr %s180, 4
        %s182 = scalar_lea.vmem [#allocation7], %s181
        // Predicated region
        $region29: #{tpu_custom_call.1} parent=23 // pred_check
          %p183 = pneg %p67
        $region30: #{tpu_custom_call.1} parent=23 // pred_check_branch
          %185 = sbr.rel (%p183) target = $region32
        $region31: #{tpu_custom_call.1} parent=23 // pred_region
          %s187 = ssub.s32 64, 64
          %188 = vsyncadd %s179, %s187
          %s189 = smul.addr %s23, 64
          %s190 = scalar_lea.hbm %s2, %s189
          %s192 = sshll.u32 %s182, 4
          %s193 = int_to_ptr.vmem [resolvable:$true] %s192
          %195 = dma.vmem_to_hbm [thread:$0]  %s193, 64, %s190, %s179
        $region32: #{tpu_custom_call.1} parent=23 // pred_fallthru
          _
      $region24: #{tpu_custom_call.1} parent=5 // pred_fallthru
        _
      %p196 = scmp.le.s32.totalorder 2, %s18
      // Predicated region
      $region33: #{tpu_custom_call.1} parent=5 // pred_check
        %p197 = pneg %p196
      $region34: #{tpu_custom_call.1} parent=5 // pred_check_branch
        %199 = sbr.rel (%p197) target = $region36
      $region35: #{tpu_custom_call.1} parent=5 // pred_region
        %s200 = ssub.s32 %s18, 2
        // Predicated region
        $region37: #{tpu_custom_call.1} parent=35 // pred_check
          %p201 = pneg %p73
        $region38: #{tpu_custom_call.1} parent=35 // pred_check_branch
          %203 = sbr.rel (%p201) target = $region40
        $region39: #{tpu_custom_call.1} parent=35 // pred_region
          %s204 = sand.u32 %s58, 1
          %s205 = scalar_lea.sflag [#allocation6], %s204
          %s206 = sand.u32 %s58, 1
          %s207 = smul.addr %s206, 4
          %s208 = scalar_lea.vmem [#allocation7], %s207
          %209 = dma.done %s205, 64
        $region40: #{tpu_custom_call.1} parent=35 // pred_fallthru
          _
      $region36: #{tpu_custom_call.1} parent=5 // pred_fallthru
        _
    $region6: #{tpu_custom_call.1} parent=1 // loop_footer
      %s22 = sadd.s32 1, %s18
    $region7: #{tpu_custom_call.1} parent=1 // loop_footer_branch
      %17 = sbr.rel target = $region3
    $region8: #{tpu_custom_call.1} parent=1 // loop_exit
      _
    %210 = vsyncpa [#allocation5], 1
    %s211 = scalar_lea.sflag [#allocation5], 1
    %212 = vsyncpa %s211, 1
    %213 = vsyncpa [#allocation6], 1
    %s214 = scalar_lea.sflag [#allocation6], 1
    %215 = vsyncpa %s214, 1

</llo_original>
